<compile_context>
chip_gen: v7x
topology: tpu7x:2x2x1
jax: 0.10.0
libtpu: 0.0.40
codegen_flags: <defaults>
</compile_context>

<pallas_src>
import functools

import jax
import jax.numpy as jnp
from jax import lax
from jax.experimental import pallas as pl
from jax.experimental.pallas import tpu as pltpu

BN_EPS = 1e-5


def _encoder_kernel(layer_dims, dim_latent, x_ref, *refs):
    """layer_dims: (d0, d1, ..., dL) static feature sizes of the MLP.

    refs layout (after x_ref):
      w_0 ... w_{L-1}                       L weight refs
      small_params  (2L+1, P)               rows 2i/2i+1 = gamma_i/beta_i,
                                            row 2L = [mean_b | sigma_b]
      head_w        (d_L, 2*dim_latent)     [mean_w | sigma_w]
      noise         (B, dim_latent)
      z_ref, kl_ref                         outputs
    """
    L = len(layer_dims) - 1
    w_refs = refs[:L]
    sp_ref = refs[L]
    head_w_ref = refs[L + 1]
    noise_ref = refs[L + 2]
    z_ref = refs[L + 3]
    kl_ref = refs[L + 4]

    sp = sp_ref[...]                       # (2L+1, P) small params, one load
    h = x_ref[...].astype(jnp.float32)

    for i in range(L):
        d = layer_dims[i + 1]
        # Linear (bias omitted: cancelled exactly by the BN mean subtraction).
        h = jnp.dot(h, w_refs[i][...], preferred_element_type=jnp.float32)

        # BatchNorm1d (training mode, biased batch stats) folded to one affine.
        mu = jnp.mean(h, axis=0, keepdims=True)                 # (1, d)
        var = jnp.mean(h * h, axis=0, keepdims=True) - mu * mu  # (1, d)
        gamma = sp[2 * i:2 * i + 1, :d]
        beta = sp[2 * i + 1:2 * i + 2, :d]
        scale = gamma * lax.rsqrt(var + BN_EPS)                 # (1, d)
        shift = beta - mu * scale                               # (1, d)

        # normalize + ReLU
        h = jnp.maximum(h * scale + shift, 0.0)

    # Fused mean/sigma head: one matmul, then slice.
    head_b = sp[2 * L:2 * L + 1, :2 * dim_latent]
    head = jnp.dot(h, head_w_ref[...], preferred_element_type=jnp.float32) + head_b
    mean = head[:, :dim_latent]
    log_sigma = head[:, dim_latent:2 * dim_latent]
    sigma = jnp.exp(log_sigma)

    # z = mean + sigma * N(0, 1) sample
    z_ref[...] = mean + sigma * noise_ref[...]

    # kl = sum(sigma^2 + mean^2 - log(sigma) - 1/2)
    kl = jnp.sum(sigma * sigma + mean * mean - log_sigma - 0.5)
    kl_ref[...] = jnp.reshape(kl, (1, 1))


@jax.jit
def encoder_forward(x, params, noise):
    """Encoder forward pass in a single Pallas kernel.

    Returns (z, kl): z is (B, dim_latent), kl is a scalar.
    """
    mlp = params["mlp"]
    L = len(mlp)
    B = x.shape[0]
    layer_dims = tuple([x.shape[1]] + [w.shape[1] for (w, _, _, _) in mlp])
    dim_latent = params["mean_w"].shape[1]

    # ---- pack small params into one array (one DMA instead of 2L+2) ----
    P = max(max(layer_dims[1:]), 2 * dim_latent)
    rows = []
    for (_, _, g, bt) in mlp:
        rows.append(jnp.pad(g, ((0, 0), (0, P - g.shape[1]))))
        rows.append(jnp.pad(bt, ((0, 0), (0, P - bt.shape[1]))))
    head_b = jnp.concatenate([params["mean_b"], params["sigma_b"]], axis=1)
    rows.append(jnp.pad(head_b, ((0, 0), (0, P - head_b.shape[1]))))
    small_params = jnp.concatenate(rows, axis=0)        # (2L+1, P)

    # ---- fuse the two head weight matrices into one ----
    head_w = jnp.concatenate([params["mean_w"], params["sigma_w"]], axis=1)

    flat_inputs = [x] + [w for (w, _, _, _) in mlp] + [small_params, head_w, noise]

    kernel = functools.partial(_encoder_kernel, layer_dims, dim_latent)
    vmem = pl.BlockSpec(memory_space=pltpu.MemorySpace.VMEM)

    z, kl = pl.pallas_call(
        kernel,
        out_shape=(
            jax.ShapeDtypeStruct((B, dim_latent), jnp.float32),
            jax.ShapeDtypeStruct((1, 1), jnp.float32),
        ),
        in_specs=[vmem] * len(flat_inputs),
        out_specs=(vmem, vmem),
    )(*flat_inputs)
    # TODO(synk): at production batch sizes, add a batch grid with
    # dimension_semantics=("parallel",) and a two-pass BN reduction so v7x's
    # two TensorCores are both used; pointless at B=8.
    return z, kl[0, 0]


def init_encoder_params(key, dim_in, dim_latent, dim_out, layer_num):
    """PyTorch-style uniform +-1/sqrt(fan_in) init (Linear), BN gamma=1/beta=0."""

    def linear(key, fan_in, fan_out):
        kw, kb = jax.random.split(key)
        bound = 1.0 / jnp.sqrt(fan_in)
        w = jax.random.uniform(kw, (fan_in, fan_out), jnp.float32, -bound, bound)
        b = jax.random.uniform(kb, (1, fan_out), jnp.float32, -bound, bound)
        return w, b

    dims = [dim_in - (dim_in - dim_out) * i // layer_num
            for i in range(layer_num + 1)]

    keys = jax.random.split(key, layer_num + 2)
    mlp = []
    for i in range(layer_num):
        w, b = linear(keys[i], dims[i], dims[i + 1])
        gamma = jnp.ones((1, dims[i + 1]), jnp.float32)
        beta = jnp.zeros((1, dims[i + 1]), jnp.float32)
        mlp.append((w, b, gamma, beta))

    mean_w, mean_b = linear(keys[layer_num], dim_out, dim_latent)
    sigma_w, sigma_b = linear(keys[layer_num + 1], dim_out, dim_latent)

    return {"mlp": mlp, "mean_w": mean_w, "mean_b": mean_b,
            "sigma_w": sigma_w, "sigma_b": sigma_b}


if __name__ == "__main__":
    # Small config consistent with the module's __init__.
    dim_in, dim_latent, dim_out, layer_num = 32, 8, 16, 2
    batch = 8

    key = jax.random.PRNGKey(0)
    k_param, k_x, k_noise = jax.random.split(key, 3)

    params = init_encoder_params(k_param, dim_in, dim_latent, dim_out, layer_num)
    x = jax.random.normal(k_x, (batch, dim_in), jnp.float32)
    # Standard-normal reparameterization noise, sampled outside the kernel for
    # determinism (matches self.noise_distribution.sample(mean.shape)).
    noise = jax.random.normal(k_noise, (batch, dim_latent), jnp.float32)

    z, kl = encoder_forward(x, params, noise)
    jax.block_until_ready((z, kl))

    # Pure-JAX reference of the ORIGINAL formulation (with Linear bias and
    # standard two-pass BN) to verify the algebraic simplifications.
    h = x
    for (w, b, g, bt) in params["mlp"]:
        h = h @ w + b
        mu = jnp.mean(h, axis=0, keepdims=True)
        var = jnp.mean((h - mu) ** 2, axis=0, keepdims=True)
        h = (h - mu) * jax.lax.rsqrt(var + BN_EPS) * g + bt
        h = jnp.maximum(h, 0.0)
    mean_ref = h @ params["mean_w"] + params["mean_b"]
    log_sigma_ref = h @ params["sigma_w"] + params["sigma_b"]
    sigma_ref = jnp.exp(log_sigma_ref)
    z_ref = mean_ref + sigma_ref * noise
    kl_ref = jnp.sum(sigma_ref ** 2 + mean_ref ** 2 - log_sigma_ref - 0.5)

    assert jnp.allclose(z, z_ref, atol=1e-4, rtol=1e-4), "z mismatch"
    assert jnp.allclose(kl, kl_ref, atol=1e-3, rtol=1e-4), "kl mismatch"

    print("KERNEL_OK")
</pallas_src>

<mosaic_0001>
module attributes {stable_mosaic.version = 11 : i64} {
  func.func @_encoder_kernel(%arg0: memref<8x32xf32, #tpu.memory_space<vmem>>, %arg1: memref<32x24xf32, #tpu.memory_space<vmem>>, %arg2: memref<24x16xf32, #tpu.memory_space<vmem>>, %arg3: memref<5x24xf32, #tpu.memory_space<vmem>>, %arg4: memref<16x16xf32, #tpu.memory_space<vmem>>, %arg5: memref<8x8xf32, #tpu.memory_space<vmem>>, %arg6: memref<8x8xf32, #tpu.memory_space<vmem>>, %arg7: memref<1x1xf32, #tpu.memory_space<vmem>>) attributes {dimension_semantics = [], scalar_prefetch = 0 : i64, scratch_operands = 0 : i64, tpu.core_type = #tpu.core_type<tc>} {
    %c0 = arith.constant 0 : index
    %c0_0 = arith.constant 0 : index
    %0 = vector.load %arg3[%c0, %c0_0] : memref<5x24xf32, #tpu.memory_space<vmem>>, vector<5x24xf32>
    %c0_1 = arith.constant 0 : index
    %c0_2 = arith.constant 0 : index
    %1 = vector.load %arg0[%c0_1, %c0_2] : memref<8x32xf32, #tpu.memory_space<vmem>>, vector<8x32xf32>
    %c0_3 = arith.constant 0 : index
    %c0_4 = arith.constant 0 : index
    %2 = vector.load %arg1[%c0_3, %c0_4] : memref<32x24xf32, #tpu.memory_space<vmem>>, vector<32x24xf32>
    %cst = arith.constant dense<0.000000e+00> : vector<8x24xf32>
    %3 = tpu.matmul %1, %2, %cst {dimension_numbers = #tpu.dot_dimension_numbers<[1], [0], [0], [1], [0, 0, 1, 1], [], []>} : vector<8x32xf32>, vector<32x24xf32>, vector<8x24xf32> -> vector<8x24xf32>
    %cst_5 = arith.constant dense<0.000000e+00> : vector<24xf32>
    %4 = vector.multi_reduction <add>, %3, %cst_5 [0] : vector<8x24xf32> to vector<24xf32>
    %5 = vector.shape_cast %4 : vector<24xf32> to vector<1x24xf32>
    %cst_6 = arith.constant 8.000000e+00 : f32
    %6 = vector.broadcast %cst_6 : f32 to vector<1x24xf32>
    %7 = arith.divf %5, %6 : vector<1x24xf32>
    %8 = arith.mulf %3, %3 : vector<8x24xf32>
    %cst_7 = arith.constant dense<0.000000e+00> : vector<24xf32>
    %9 = vector.multi_reduction <add>, %8, %cst_7 [0] : vector<8x24xf32> to vector<24xf32>
    %10 = vector.shape_cast %9 : vector<24xf32> to vector<1x24xf32>
    %cst_8 = arith.constant 8.000000e+00 : f32
    %11 = vector.broadcast %cst_8 : f32 to vector<1x24xf32>
    %12 = arith.divf %10, %11 : vector<1x24xf32>
    %13 = arith.mulf %7, %7 : vector<1x24xf32>
    %14 = arith.subf %12, %13 : vector<1x24xf32>
    %15 = vector.extract_strided_slice %0 {offsets = [0, 0], sizes = [1, 24], strides = [1, 1]} : vector<5x24xf32> to vector<1x24xf32>
    %16 = vector.extract_strided_slice %0 {offsets = [1, 0], sizes = [1, 24], strides = [1, 1]} : vector<5x24xf32> to vector<1x24xf32>
    %cst_9 = arith.constant 9.99999974E-6 : f32
    %17 = vector.broadcast %cst_9 : f32 to vector<1x24xf32>
    %18 = arith.addf %14, %17 : vector<1x24xf32>
    %19 = math.rsqrt %18 : vector<1x24xf32>
    %20 = arith.mulf %15, %19 : vector<1x24xf32>
    %21 = arith.mulf %7, %20 : vector<1x24xf32>
    %22 = arith.subf %16, %21 : vector<1x24xf32>
    %23 = vector.broadcast %20 : vector<1x24xf32> to vector<8x24xf32>
    %24 = arith.mulf %3, %23 : vector<8x24xf32>
    %25 = vector.broadcast %22 : vector<1x24xf32> to vector<8x24xf32>
    %26 = arith.addf %24, %25 : vector<8x24xf32>
    %cst_10 = arith.constant 0.000000e+00 : f32
    %27 = vector.broadcast %cst_10 : f32 to vector<8x24xf32>
    %28 = arith.maximumf %26, %27 : vector<8x24xf32>
    %c0_11 = arith.constant 0 : index
    %c0_12 = arith.constant 0 : index
    %29 = vector.load %arg2[%c0_11, %c0_12] : memref<24x16xf32, #tpu.memory_space<vmem>>, vector<24x16xf32>
    %cst_13 = arith.constant dense<0.000000e+00> : vector<8x16xf32>
    %30 = tpu.matmul %28, %29, %cst_13 {dimension_numbers = #tpu.dot_dimension_numbers<[1], [0], [0], [1], [0, 0, 1, 1], [], []>} : vector<8x24xf32>, vector<24x16xf32>, vector<8x16xf32> -> vector<8x16xf32>
    %cst_14 = arith.constant dense<0.000000e+00> : vector<16xf32>
    %31 = vector.multi_reduction <add>, %30, %cst_14 [0] : vector<8x16xf32> to vector<16xf32>
    %32 = vector.shape_cast %31 : vector<16xf32> to vector<1x16xf32>
    %cst_15 = arith.constant 8.000000e+00 : f32
    %33 = vector.broadcast %cst_15 : f32 to vector<1x16xf32>
    %34 = arith.divf %32, %33 : vector<1x16xf32>
    %35 = arith.mulf %30, %30 : vector<8x16xf32>
    %cst_16 = arith.constant dense<0.000000e+00> : vector<16xf32>
    %36 = vector.multi_reduction <add>, %35, %cst_16 [0] : vector<8x16xf32> to vector<16xf32>
    %37 = vector.shape_cast %36 : vector<16xf32> to vector<1x16xf32>
    %cst_17 = arith.constant 8.000000e+00 : f32
    %38 = vector.broadcast %cst_17 : f32 to vector<1x16xf32>
    %39 = arith.divf %37, %38 : vector<1x16xf32>
    %40 = arith.mulf %34, %34 : vector<1x16xf32>
    %41 = arith.subf %39, %40 : vector<1x16xf32>
    %42 = vector.extract_strided_slice %0 {offsets = [2, 0], sizes = [1, 16], strides = [1, 1]} : vector<5x24xf32> to vector<1x16xf32>
    %43 = vector.extract_strided_slice %0 {offsets = [3, 0], sizes = [1, 16], strides = [1, 1]} : vector<5x24xf32> to vector<1x16xf32>
    %cst_18 = arith.constant 9.99999974E-6 : f32
    %44 = vector.broadcast %cst_18 : f32 to vector<1x16xf32>
    %45 = arith.addf %41, %44 : vector<1x16xf32>
    %46 = math.rsqrt %45 : vector<1x16xf32>
    %47 = arith.mulf %42, %46 : vector<1x16xf32>
    %48 = arith.mulf %34, %47 : vector<1x16xf32>
    %49 = arith.subf %43, %48 : vector<1x16xf32>
    %50 = vector.broadcast %47 : vector<1x16xf32> to vector<8x16xf32>
    %51 = arith.mulf %30, %50 : vector<8x16xf32>
    %52 = vector.broadcast %49 : vector<1x16xf32> to vector<8x16xf32>
    %53 = arith.addf %51, %52 : vector<8x16xf32>
    %cst_19 = arith.constant 0.000000e+00 : f32
    %54 = vector.broadcast %cst_19 : f32 to vector<8x16xf32>
    %55 = arith.maximumf %53, %54 : vector<8x16xf32>
    %56 = vector.extract_strided_slice %0 {offsets = [4, 0], sizes = [1, 16], strides = [1, 1]} : vector<5x24xf32> to vector<1x16xf32>
    %c0_20 = arith.constant 0 : index
    %c0_21 = arith.constant 0 : index
    %57 = vector.load %arg4[%c0_20, %c0_21] : memref<16x16xf32, #tpu.memory_space<vmem>>, vector<16x16xf32>
    %cst_22 = arith.constant dense<0.000000e+00> : vector<8x16xf32>
    %58 = tpu.matmul %55, %57, %cst_22 {dimension_numbers = #tpu.dot_dimension_numbers<[1], [0], [0], [1], [0, 0, 1, 1], [], []>} : vector<8x16xf32>, vector<16x16xf32>, vector<8x16xf32> -> vector<8x16xf32>
    %59 = vector.broadcast %56 : vector<1x16xf32> to vector<8x16xf32>
    %60 = arith.addf %58, %59 : vector<8x16xf32>
    %61 = vector.extract_strided_slice %60 {offsets = [0, 0], sizes = [8, 8], strides = [1, 1]} : vector<8x16xf32> to vector<8x8xf32>
    %62 = vector.extract_strided_slice %60 {offsets = [0, 8], sizes = [8, 8], strides = [1, 1]} : vector<8x16xf32> to vector<8x8xf32>
    %63 = math.exp %62 : vector<8x8xf32>
    %c0_23 = arith.constant 0 : index
    %c0_24 = arith.constant 0 : index
    %64 = vector.load %arg5[%c0_23, %c0_24] : memref<8x8xf32, #tpu.memory_space<vmem>>, vector<8x8xf32>
    %65 = arith.mulf %63, %64 : vector<8x8xf32>
    %66 = arith.addf %61, %65 : vector<8x8xf32>
    %c0_25 = arith.constant 0 : index
    %c0_26 = arith.constant 0 : index
    %67 = vector.load %arg6[%c0_25, %c0_26] : memref<8x8xf32, #tpu.memory_space<vmem>>, vector<8x8xf32>
    tpu.vector_store %arg6[%c0_25, %c0_26], %66 {strides = array<i32>} : memref<8x8xf32, #tpu.memory_space<vmem>>, vector<8x8xf32>,
    %68 = arith.mulf %63, %63 : vector<8x8xf32>
    %69 = arith.mulf %61, %61 : vector<8x8xf32>
    %70 = arith.addf %68, %69 : vector<8x8xf32>
    %71 = arith.subf %70, %62 : vector<8x8xf32>
    %cst_27 = arith.constant 5.000000e-01 : f32
    %72 = vector.broadcast %cst_27 : f32 to vector<8x8xf32>
    %73 = arith.subf %71, %72 : vector<8x8xf32>
    %74 = vector.shape_cast %73 : vector<8x8xf32> to vector<1x8x8xf32>
    %cst_28 = arith.constant dense<0.000000e+00> : vector<1xf32>
    %75 = vector.multi_reduction <add>, %74, %cst_28 [1, 2] : vector<1x8x8xf32> to vector<1xf32>
    %76 = vector.shape_cast %75 : vector<1xf32> to vector<1x1x1xf32>
    %77 = vector.extract %76[0, 0, 0] : f32 from vector<1x1x1xf32>
    %78 = vector.broadcast %77 : f32 to vector<1x1xf32>
    %c0_29 = arith.constant 0 : index
    %c0_30 = arith.constant 0 : index
    %79 = vector.load %arg7[%c0_29, %c0_30] : memref<1x1xf32, #tpu.memory_space<vmem>>, vector<1x1xf32>
    tpu.vector_store %arg7[%c0_29, %c0_30], %78 {strides = array<i32>} : memref<1x1xf32, #tpu.memory_space<vmem>>, vector<1x1xf32>,
    return
  }
}

</mosaic_0001>

<llo_original>
// kernel: encoder_forward.1
$region0: #{encoder_forward.1}
  #allocation0 [shape = 'u32[]', space=smem, size = 0x4, offset = 0x4, fixed_abs, tag = 'smem constant byte address 0x4 - core index']
  #allocation1 [shape = 'u32[144,128]{1,0:T(1,128)}', space=vmem, size = 0x12000, scoped, tag = 'internal scratch']
  %s0 = inlined_call_operand.vmem [shape: f32[8,32], index: 0, kind: input, shape index: {}]
  %s1 = inlined_call_operand.vmem [shape: f32[32,24], index: 1, kind: input, shape index: {}]
  %s2 = inlined_call_operand.vmem [shape: f32[24,16], index: 2, kind: input, shape index: {}]
  %s3 = inlined_call_operand.vmem [shape: f32[5,24], index: 3, kind: input, shape index: {}]
  %s4 = inlined_call_operand.vmem [shape: f32[16,16], index: 4, kind: input, shape index: {}]
  %s5 = inlined_call_operand.vmem [shape: f32[8,8], index: 5, kind: input, shape index: {}]
  %s6 = inlined_call_operand.hbm [shape: f32[8,8], index: 6, kind: output, shape index: {0}]
  %s7 = inlined_call_operand.hbm [shape: f32[1,1], index: 7, kind: output, shape index: {1}]
  %8 = xla_tuple %s6, %s7
  %s9 = sld [smem:[#allocation0]]
  $region42: #{encoder_forward.1} parent=0
    _
  %s11 = ssub.s32 1, %s9
  %s12 = scalar_select 0, %s11, %s9
  $region1: #{encoder_forward.1} parent=0
    #allocation2 [shape = 'u8[4096]{0}', space=vmem, size = 0x1000, scoped, tag = 'output window, operand 0, single buffered']
    #allocation3 [shape = 's32[1]{0}', space=sflag, size = 0x4, scoped, tag = 'scoped memory for encoder_forward.1']
    #allocation4 [shape = 'u8[512]{0}', space=vmem, size = 0x400, scoped, tag = 'output window, operand 1, single buffered']
    #allocation5 [shape = 's32[1]{0}', space=sflag, size = 0x4, scoped, tag = 'scoped memory for encoder_forward.1']
    %13 = vsyncpa [#allocation3], 0
    %14 = vsyncpa [#allocation5], 0
    // Predicated region
    $region2: #{encoder_forward.1} parent=1 // pred_check
      _
    $region3: #{encoder_forward.1} parent=1 // pred_check_branch
      %16 = sbr.rel (0) target = $region5
    $region4: #{encoder_forward.1} parent=1 // pred_region
      _
    $region5: #{encoder_forward.1} parent=1 // pred_fallthru
      _
    // Predicated region
    $region6: #{encoder_forward.1} parent=1 // pred_check
      _
    $region7: #{encoder_forward.1} parent=1 // pred_check_branch
      %18 = sbr.rel (0) target = $region9
    $region8: #{encoder_forward.1} parent=1 // pred_region
      _
    $region9: #{encoder_forward.1} parent=1 // pred_fallthru
      _
    // Predicated region
    $region10: #{encoder_forward.1} parent=1 // pred_check
      _
    $region11: #{encoder_forward.1} parent=1 // pred_check_branch
      %20 = sbr.rel (0) target = $region13
    $region12: #{encoder_forward.1} parent=1 // pred_region
      _
    $region13: #{encoder_forward.1} parent=1 // pred_fallthru
      _
    // Predicated region
    $region14: #{encoder_forward.1} parent=1 // pred_check
      _
    $region15: #{encoder_forward.1} parent=1 // pred_check_branch
      %22 = sbr.rel (0) target = $region17
    $region16: #{encoder_forward.1} parent=1 // pred_region
      _
    $region17: #{encoder_forward.1} parent=1 // pred_fallthru
      _
    // Predicated region
    $region18: #{encoder_forward.1} parent=1 // pred_check
      _
    $region19: #{encoder_forward.1} parent=1 // pred_check_branch
      %24 = sbr.rel (0) target = $region21
    $region20: #{encoder_forward.1} parent=1 // pred_region
      _
    $region21: #{encoder_forward.1} parent=1 // pred_fallthru
      _
    // Predicated region
    $region22: #{encoder_forward.1} parent=1 // pred_check
      _
    $region23: #{encoder_forward.1} parent=1 // pred_check_branch
      %26 = sbr.rel (0) target = $region25
    $region24: #{encoder_forward.1} parent=1 // pred_region
      _
    $region25: #{encoder_forward.1} parent=1 // pred_fallthru
      _
    %v27 = vld [vmem:[%s3] sm:$0x1f]
    %v28 = vld [vmem:[%s0] sm:$0xff]
    %v29 = vld [vmem:[%s1] sm:$0xff]
    %v30 = vld [vmem:[%s1 + $0x8] sm:$0xff]
    %v31 = vld [vmem:[%s1 + $0x10] sm:$0xff]
    %v32 = vld [vmem:[%s1 + $0x18] sm:$0xff]
    %vm33 = vcmask 261120
    %v35 = vsel %vm33, %v28, 0
    %37 = vmatprep.subr.mxu0 0.0
    %38 = vmatpush1.msra.mxu0 %v29
    %39 = vmatprep.subr.mxu0 0.0
    %40 = vmatpush1.msra.mxu0 %v30
    %41 = vmatprep.subr.mxu0 0.0
    %42 = vmatpush1.msra.mxu0 %v31
    %43 = vmatprep.subr.mxu0 0.0
    %44 = vmatpush1.msra.mxu0 %v32
    %45 = vmatprep.subr.mxu0 0.0
    %46 = vmatpush1.msra.mxu0 0.0
    %47 = vmatprep.subr.mxu0 0.0
    %48 = vmatpush1.msra.mxu0 0.0
    %49 = vmatprep.subr.mxu0 0.0
    %50 = vmatpush1.msra.mxu0 0.0
    %51 = vmatprep.subr.mxu0 0.0
    %52 = vmatpush1.msra.mxu0 0.0
    %53 = vmatprep.subr.mxu0 0.0
    %54 = vmatpush1.msra.mxu0 0.0
    %55 = vmatprep.subr.mxu0 0.0
    %56 = vmatpush1.msra.mxu0 0.0
    %57 = vmatprep.subr.mxu0 0.0
    %58 = vmatpush1.msra.mxu0 0.0
    %59 = vmatprep.subr.mxu0 0.0
    %60 = vmatpush1.msra.mxu0 0.0
    %61 = vmatprep.subr.mxu0 0.0
    %62 = vmatpush1.msra.mxu0 0.0
    %63 = vmatprep.subr.mxu0 0.0
    %64 = vmatpush1.msra.mxu0 0.0
    %65 = vmatprep.subr.mxu0 0.0
    %66 = vmatpush1.msra.mxu0 0.0
    %67 = vmatprep.subr.mxu0 0.0
    %68 = vmatpush1.msra.mxu0 0.0
    %69 = vmatprep.subr.mxu0 0.0
    %70 = vmatpush1.msra.mxu0 0.0
    %71 = vmatprep.subr.mxu0 0.0
    %72 = vmatpush1.msra.mxu0 0.0
    %73 = vmatprep.subr.mxu0 0.0
    %74 = vmatpush1.msra.mxu0 0.0
    %75 = vmatprep.subr.mxu0 0.0
    %76 = vmatpush1.msra.mxu0 0.0
    %77 = vmatprep.subr.mxu0 0.0
    %78 = vmatpush1.msra.mxu0 0.0
    %79 = vmatprep.subr.mxu0 0.0
    %80 = vmatpush1.msra.mxu0 0.0
    %81 = vmatprep.subr.mxu0 0.0
    %82 = vmatpush1.msra.mxu0 0.0
    %83 = vmatprep.subr.mxu0 0.0
    %84 = vmatpush1.msra.mxu0 0.0
    %85 = vmatprep.subr.mxu0 0.0
    %86 = vmatpush1.msra.mxu0 0.0
    %87 = vmatprep.subr.mxu0 0.0
    %88 = vmatpush1.msra.mxu0 0.0
    %89 = vmatprep.subr.mxu0 0.0
    %90 = vmatpush1.msra.mxu0 0.0
    %91 = vmatprep.subr.mxu0 0.0
    %92 = vmatpush1.msra.mxu0 0.0
    %93 = vmatprep.subr.mxu0 0.0
    %94 = vmatpush1.msra.mxu0 0.0
    %95 = vmatprep.subr.mxu0 0.0
    %96 = vmatpush1.msra.mxu0 0.0
    %97 = vmatprep.subr.mxu0 0.0
    %98 = vmatpush1.msra.mxu0 0.0
    %99 = vmatprep.subr.mxu0 0.0
    %100 = vmatpush1.msra.mxu0 0.0
    %101 = vmatprep.mubr.f32.mxu0 0.0
    %102 = vmatmul.mubr.f32.gmra.mrb[0].mxu0 %v35
    %v103 = vpop.f32.mrb[0].mxu0
    %v104 = vadd.f32 0.0, %v103
    %v105 = vpop.f32.mrb[0].mxu0
    %106 = vdwg.mxu0
    %vm107 = vcmask 195584
    %v108 = vsel %vm107, %v104, 0.0
    %v109 = vrot.slane %v108, 4
    %v110 = vadd.f32 %v108, %v109
    %v111 = vrot.slane %v110, 2
    %v112 = vadd.f32 %v110, %v111
    %v113 = vrot.slane %v112, 1
    %v114 = vadd.f32 %v112, %v113
    %v115 = vrcp.pop 8.0
    %v116 = vmul.f32 %v114, %v115
    %v117 = vmul.f32 %v104, %v104
    %v118 = vsel %vm107, %v117, 0.0
    %v119 = vrot.slane %v118, 4
    %v120 = vadd.f32 %v118, %v119
    %v121 = vrot.slane %v120, 2
    %v122 = vadd.f32 %v120, %v121
    %v123 = vrot.slane %v122, 1
    %v124 = vadd.f32 %v122, %v123
    %v125 = vmul.f32 %v124, %v115
    %v126 = vmul.f32 %v116, %v116
    %v127 = vsub.f32 %v125, %v126
    %v128 = vadd.f32 %v127, 1e-05
    %v129 = vrsqrt.pop %v128
    %v130 = vmul.f32 %v27, %v129
    %v131 = vmul.f32 %v116, %v130
    %v133 = vrot.slane %v131, 7
    %v135 = vsub.f32 %v27, %v133
    %v136 = vlaneseq
    %v137 = vshrl.u32 %v136, 7
    %v138 = vsub.s32 0, %v137
    %v139 = vrot.slane %v130, %v138
    %v140 = vmul.f32 %v104, %v139
    %v141 = vlaneseq
    %v142 = vshrl.u32 %v141, 7
    %v143 = vsub.s32 1, %v142
    %v144 = vrot.slane %v135, %v143
    %v145 = vadd.f32 %v140, %v144
    %v146 = vmax.f32 %v145, 0.0
    %v147 = vld [vmem:[%s2] sm:$0xff]
    %v148 = vld [vmem:[%s2 + $0x8] sm:$0xff]
    %v149 = vld [vmem:[%s2 + $0x10] sm:$0xff]
    %v151 = vsel %vm107, %v146, 0
    %153 = vmatprep.subr.mxu0 0.0
    %154 = vmatpush1.msra.mxu0 %v147
    %155 = vmatprep.subr.mxu0 0.0
    %156 = vmatpush1.msra.mxu0 %v148
    %157 = vmatprep.subr.mxu0 0.0
    %158 = vmatpush1.msra.mxu0 %v149
    %159 = vmatprep.subr.mxu0 0.0
    %160 = vmatpush1.msra.mxu0 0.0
    %161 = vmatprep.subr.mxu0 0.0
    %162 = vmatpush1.msra.mxu0 0.0
    %163 = vmatprep.subr.mxu0 0.0
    %164 = vmatpush1.msra.mxu0 0.0
    %165 = vmatprep.subr.mxu0 0.0
    %166 = vmatpush1.msra.mxu0 0.0
    %167 = vmatprep.subr.mxu0 0.0
    %168 = vmatpush1.msra.mxu0 0.0
    %169 = vmatprep.subr.mxu0 0.0
    %170 = vmatpush1.msra.mxu0 0.0
    %171 = vmatprep.subr.mxu0 0.0
    %172 = vmatpush1.msra.mxu0 0.0
    %173 = vmatprep.subr.mxu0 0.0
    %174 = vmatpush1.msra.mxu0 0.0
    %175 = vmatprep.subr.mxu0 0.0
    %176 = vmatpush1.msra.mxu0 0.0
    %177 = vmatprep.subr.mxu0 0.0
    %178 = vmatpush1.msra.mxu0 0.0
    %179 = vmatprep.subr.mxu0 0.0
    %180 = vmatpush1.msra.mxu0 0.0
    %181 = vmatprep.subr.mxu0 0.0
    %182 = vmatpush1.msra.mxu0 0.0
    %183 = vmatprep.subr.mxu0 0.0
    %184 = vmatpush1.msra.mxu0 0.0
    %185 = vmatprep.subr.mxu0 0.0
    %186 = vmatpush1.msra.mxu0 0.0
    %187 = vmatprep.subr.mxu0 0.0
    %188 = vmatpush1.msra.mxu0 0.0
    %189 = vmatprep.subr.mxu0 0.0
    %190 = vmatpush1.msra.mxu0 0.0
    %191 = vmatprep.subr.mxu0 0.0
    %192 = vmatpush1.msra.mxu0 0.0
    %193 = vmatprep.subr.mxu0 0.0
    %194 = vmatpush1.msra.mxu0 0.0
    %195 = vmatprep.subr.mxu0 0.0
    %196 = vmatpush1.msra.mxu0 0.0
    %197 = vmatprep.subr.mxu0 0.0
    %198 = vmatpush1.msra.mxu0 0.0
    %199 = vmatprep.subr.mxu0 0.0
    %200 = vmatpush1.msra.mxu0 0.0
    %201 = vmatprep.subr.mxu0 0.0
    %202 = vmatpush1.msra.mxu0 0.0
    %203 = vmatprep.subr.mxu0 0.0
    %204 = vmatpush1.msra.mxu0 0.0
    %205 = vmatprep.subr.mxu0 0.0
    %206 = vmatpush1.msra.mxu0 0.0
    %207 = vmatprep.subr.mxu0 0.0
    %208 = vmatpush1.msra.mxu0 0.0
    %209 = vmatprep.subr.mxu0 0.0
    %210 = vmatpush1.msra.mxu0 0.0
    %211 = vmatprep.subr.mxu0 0.0
    %212 = vmatpush1.msra.mxu0 0.0
    %213 = vmatprep.subr.mxu0 0.0
    %214 = vmatpush1.msra.mxu0 0.0
    %215 = vmatprep.subr.mxu0 0.0
    %216 = vmatpush1.msra.mxu0 0.0
    %217 = vmatprep.mubr.f32.mxu0 0.0
    %218 = vmatmul.mubr.f32.gmra.mrb[0].mxu0 %v151
    %v219 = vpop.f32.mrb[0].mxu0
    %v220 = vadd.f32 0.0, %v219
    %v221 = vpop.f32.mrb[0].mxu0
    %222 = vdwg.mxu0
    %vm223 = vcmask 130048
    %v224 = vsel %vm223, %v220, 0.0
    %v225 = vrot.slane %v224, 4
    %v226 = vadd.f32 %v224, %v225
    %v227 = vrot.slane %v226, 2
    %v228 = vadd.f32 %v226, %v227
    %v229 = vrot.slane %v228, 1
    %v230 = vadd.f32 %v228, %v229
    %v231 = vmul.f32 %v230, %v115
    %v232 = vmul.f32 %v220, %v220
    %v233 = vsel %vm223, %v232, 0.0
    %v234 = vrot.slane %v233, 4
    %v235 = vadd.f32 %v233, %v234
    %v236 = vrot.slane %v235, 2
    %v237 = vadd.f32 %v235, %v236
    %v238 = vrot.slane %v237, 1
    %v239 = vadd.f32 %v237, %v238
    %v240 = vmul.f32 %v239, %v115
    %v241 = vmul.f32 %v231, %v231
    %v242 = vsub.f32 %v240, %v241
    %v243 = vadd.f32 %v242, 1e-05
    %v244 = vrsqrt.pop %v243
    %v245 = vmul.f32 %v27, %v244
    %v246 = vmul.f32 %v231, %v245
    %v248 = vrot.slane %v246, 7
    %v250 = vsub.f32 %v27, %v248
    %v251 = vlaneseq
    %v252 = vshrl.u32 %v251, 7
    %v253 = vsub.s32 2, %v252
    %v254 = vrot.slane %v245, %v253
    %v255 = vmul.f32 %v220, %v254
    %v256 = vlaneseq
    %v257 = vshrl.u32 %v256, 7
    %v258 = vsub.s32 3, %v257
    %v259 = vrot.slane %v250, %v258
    %v260 = vadd.f32 %v255, %v259
    %v261 = vmax.f32 %v260, 0.0
    %v262 = vld [vmem:[%s4] sm:$0xff]
    %v263 = vld [vmem:[%s4 + $0x8] sm:$0xff]
    %v264 = vlaneseq
    %v265 = vshrl.u32 %v264, 7
    %v266 = vsub.s32 4, %v265
    %v267 = vrot.slane %v27, %v266
    %v269 = vsel %vm223, %v261, 0
    %271 = vmatprep.subr.mxu0 0.0
    %272 = vmatpush1.msra.mxu0 %v262
    %273 = vmatprep.subr.mxu0 0.0
    %274 = vmatpush1.msra.mxu0 %v263
    %275 = vmatprep.subr.mxu0 0.0
    %276 = vmatpush1.msra.mxu0 0.0
    %277 = vmatprep.subr.mxu0 0.0
    %278 = vmatpush1.msra.mxu0 0.0
    %279 = vmatprep.subr.mxu0 0.0
    %280 = vmatpush1.msra.mxu0 0.0
    %281 = vmatprep.subr.mxu0 0.0
    %282 = vmatpush1.msra.mxu0 0.0
    %283 = vmatprep.subr.mxu0 0.0
    %284 = vmatpush1.msra.mxu0 0.0
    %285 = vmatprep.subr.mxu0 0.0
    %286 = vmatpush1.msra.mxu0 0.0
    %287 = vmatprep.subr.mxu0 0.0
    %288 = vmatpush1.msra.mxu0 0.0
    %289 = vmatprep.subr.mxu0 0.0
    %290 = vmatpush1.msra.mxu0 0.0
    %291 = vmatprep.subr.mxu0 0.0
    %292 = vmatpush1.msra.mxu0 0.0
    %293 = vmatprep.subr.mxu0 0.0
    %294 = vmatpush1.msra.mxu0 0.0
    %295 = vmatprep.subr.mxu0 0.0
    %296 = vmatpush1.msra.mxu0 0.0
    %297 = vmatprep.subr.mxu0 0.0
    %298 = vmatpush1.msra.mxu0 0.0
    %299 = vmatprep.subr.mxu0 0.0
    %300 = vmatpush1.msra.mxu0 0.0
    %301 = vmatprep.subr.mxu0 0.0
    %302 = vmatpush1.msra.mxu0 0.0
    %303 = vmatprep.subr.mxu0 0.0
    %304 = vmatpush1.msra.mxu0 0.0
    %305 = vmatprep.subr.mxu0 0.0
    %306 = vmatpush1.msra.mxu0 0.0
    %307 = vmatprep.subr.mxu0 0.0
    %308 = vmatpush1.msra.mxu0 0.0
    %309 = vmatprep.subr.mxu0 0.0
    %310 = vmatpush1.msra.mxu0 0.0
    %311 = vmatprep.subr.mxu0 0.0
    %312 = vmatpush1.msra.mxu0 0.0
    %313 = vmatprep.subr.mxu0 0.0
    %314 = vmatpush1.msra.mxu0 0.0
    %315 = vmatprep.subr.mxu0 0.0
    %316 = vmatpush1.msra.mxu0 0.0
    %317 = vmatprep.subr.mxu0 0.0
    %318 = vmatpush1.msra.mxu0 0.0
    %319 = vmatprep.subr.mxu0 0.0
    %320 = vmatpush1.msra.mxu0 0.0
    %321 = vmatprep.subr.mxu0 0.0
    %322 = vmatpush1.msra.mxu0 0.0
    %323 = vmatprep.subr.mxu0 0.0
    %324 = vmatpush1.msra.mxu0 0.0
    %325 = vmatprep.subr.mxu0 0.0
    %326 = vmatpush1.msra.mxu0 0.0
    %327 = vmatprep.subr.mxu0 0.0
    %328 = vmatpush1.msra.mxu0 0.0
    %329 = vmatprep.subr.mxu0 0.0
    %330 = vmatpush1.msra.mxu0 0.0
    %331 = vmatprep.subr.mxu0 0.0
    %332 = vmatpush1.msra.mxu0 0.0
    %333 = vmatprep.subr.mxu0 0.0
    %334 = vmatpush1.msra.mxu0 0.0
    %335 = vmatprep.mubr.f32.mxu0 0.0
    %336 = vmatmul.mubr.f32.gmra.mrb[0].mxu0 %v269
    %v337 = vpop.f32.mrb[0].mxu0
    %v338 = vadd.f32 %v267, %v337
    %v339 = vpop.f32.mrb[0].mxu0
    %340 = vdwg.mxu0
    %v341 = vmul.f32 %v338, 1.442695
    %v342 = vpow.pop %v341
    %v343 = vld [vmem:[%s5] sm:$0xff]
    %345 = vrot.lane.b32.xlu0 %v343, 8
    %v346 = vpop.permute.xlu0 %345
    %v348 = vmul.f32 %v342, %v346
    %350 = vrot.lane.b32.xlu0 %v348, 120
    %v351 = vpop.permute.xlu0 %350
    %v353 = vadd.f32 %v338, %v351
    %vm354 = vcmask 64512
    %355 = vst.msk [vmem:[#allocation2] sm:$0xff] %vm354, %v353
    %v356 = vmul.f32 %v342, %v342
    %v357 = vmul.f32 %v338, %v338
    %359 = vrot.lane.b32.xlu0 %v357, 8
    %v360 = vpop.permute.xlu0 %359
    %v362 = vadd.f32 %v356, %v360
    %v363 = vsub.f32 %v362, %v338
    %v364 = vsub.f32 %v363, 0.5
    %366 = vrot.lane.b32.xlu0 %v364, 120
    %v367 = vpop.permute.xlu0 %366
    %v369 = vsel %vm354, %v367, 0.0
    %370 = vadd.xlane.f32.xlu0 %v369
    %v371 = vpop.xlane.xlu0 %370
    %v372 = vrot.slane %v371, 4
    %v373 = vadd.f32 %v371, %v372
    %v374 = vrot.slane %v373, 2
    %v375 = vadd.f32 %v373, %v374
    %v376 = vrot.slane %v375, 1
    %v377 = vadd.f32 %v375, %v376
    %s378 = vtos %v377
    %v379 = vstv %s378
    %vm380 = vcmask 0
    %381 = vst.msk [vmem:[#allocation4] sm:$0x1] %vm380, %v379
    // Predicated region
    $region26: #{encoder_forward.1} parent=1 // pred_check
      _
    $region27: #{encoder_forward.1} parent=1 // pred_check_branch
      %383 = sbr.rel (0) target = $region29
    $region28: #{encoder_forward.1} parent=1 // pred_region
      %s385 = ssub.s32 128, 128
      %386 = vsyncadd [#allocation3], %s385
      %s388 = sshll.u32 [#allocation2], 4
      %s389 = int_to_ptr.vmem [resolvable:$true] %s388
      %391 = dma.vmem_to_hbm [thread:$0]  %s389, 128, %s6, [#allocation3]
    $region29: #{encoder_forward.1} parent=1 // pred_fallthru
      _
    // Predicated region
    $region30: #{encoder_forward.1} parent=1 // pred_check
      _
    $region31: #{encoder_forward.1} parent=1 // pred_check_branch
      %393 = sbr.rel (0) target = $region33
    $region32: #{encoder_forward.1} parent=1 // pred_region
      %s395 = ssub.s32 16, 16
      %396 = vsyncadd [#allocation5], %s395
      %s398 = sshll.u32 [#allocation4], 4
      %s399 = int_to_ptr.vmem [resolvable:$true] %s398
      %401 = dma.vmem_to_hbm [thread:$0]  %s399, 16, %s7, [#allocation5]
    $region33: #{encoder_forward.1} parent=1 // pred_fallthru
      _
    // Predicated region
    $region34: #{encoder_forward.1} parent=1 // pred_check
      _
    $region35: #{encoder_forward.1} parent=1 // pred_check_branch
      %403 = sbr.rel (0) target = $region37
    $region36: #{encoder_forward.1} parent=1 // pred_region
      %404 = dma.done [#allocation3], 128
    $region37: #{encoder_forward.1} parent=1 // pred_fallthru
      _
    // Predicated region
    $region38: #{encoder_forward.1} parent=1 // pred_check
      _
    $region39: #{encoder_forward.1} parent=1 // pred_check_branch
      %406 = sbr.rel (0) target = $region41
    $region40: #{encoder_forward.1} parent=1 // pred_region
      %407 = dma.done [#allocation5], 16
    $region41: #{encoder_forward.1} parent=1 // pred_fallthru
      _
    %408 = vsyncpa [#allocation3], 1
    %409 = vsyncpa [#allocation5], 1

</llo_original>
